<compile_context>
chip_gen: v6e
topology: v6e:2x2x1
jax: 0.10.0
libtpu: 0.0.40
codegen_flags: <defaults>
</compile_context>

<pallas_src>
import math
import jax
import jax.numpy as jnp
from jax.experimental import pallas as pl
from jax.experimental.pallas import tpu as pltpu


# ---------------------------------------------------------------------------
# helpers
# ---------------------------------------------------------------------------
def _round_up(n, m):
    return (n + m - 1) // m * m


def _pad_to(a, target_shape):
    pads = [(0, t - s) for s, t in zip(a.shape, target_shape)]
    if all(p == (0, 0) for p in pads):
        return a
    return jnp.pad(a, pads)


def _itemsize(dt):
    return jnp.dtype(dt).itemsize


# ---------------------------------------------------------------------------
# linear + bias kernel (used for the hoisted input projection)
# ---------------------------------------------------------------------------
def linear_bias_kernel(x_ref, w_ref, b_ref, o_ref):
    # x: (tm, Kp)  w: (Kp, Hp)  b: (1, Hp) f32  o: (tm, Hp)
    acc = jnp.dot(x_ref[...], w_ref[...], preferred_element_type=jnp.float32)
    o_ref[...] = (acc + b_ref[...]).astype(o_ref.dtype)


def _linear_bias(x_p, w_p, b_p, *, out_dtype=jnp.float32, row_block=512):
    """(M, Kp) @ (Kp, Hp) + b -> (M, Hp).  All dims already lane-padded."""
    M, Kp = x_p.shape
    Hp = w_p.shape[1]

    if M <= row_block:
        # Single tile: plain whole-array VMEM call (no pointless pipeline).
        return pl.pallas_call(
            linear_bias_kernel,
            out_shape=jax.ShapeDtypeStruct((M, Hp), out_dtype),
            in_specs=[pl.BlockSpec(memory_space=pltpu.MemorySpace.VMEM)] * 3,
            out_specs=pl.BlockSpec(memory_space=pltpu.MemorySpace.VMEM),
        )(x_p, w_p, b_p)

    tm = row_block
    Mp = _round_up(M, tm)
    x_pp = _pad_to(x_p, (Mp, Kp))

    resident = (2 * tm * Kp * _itemsize(x_pp.dtype)      # x blocks (double-buffered)
                + 2 * tm * Hp * _itemsize(out_dtype)     # out blocks
                + Kp * Hp * _itemsize(w_p.dtype)         # W (single-buffered)
                + Hp * 4)                                # bias
    vmem_limit = int(min(64 << 20, max(2 * resident + (1 << 20), 16 << 20)))

    out = pl.pallas_call(
        linear_bias_kernel,
        out_shape=jax.ShapeDtypeStruct((Mp, Hp), out_dtype),
        grid=(Mp // tm,),
        in_specs=[
            pl.BlockSpec((tm, Kp), lambda i: (i, 0)),
            pl.BlockSpec((Kp, Hp), lambda i: (0, 0),
                         pipeline_mode=pl.Buffered(1)),   # resident weight
            pl.BlockSpec((1, Hp), lambda i: (0, 0),
                         pipeline_mode=pl.Buffered(1)),   # resident bias
        ],
        out_specs=pl.BlockSpec((tm, Hp), lambda i: (i, 0)),
        compiler_params=pltpu.CompilerParams(
            dimension_semantics=("parallel",),
            vmem_limit_bytes=vmem_limit,
        ),
    )(x_pp, w_p, b_p)
    return out[:M]


# ---------------------------------------------------------------------------
# single-step RNN cell: two MXU dots into one f32 accumulator, f32 bias + ReLU
# ---------------------------------------------------------------------------
def rnn_cell_kernel(x_ref, h_ref, wih_ref, whh_ref, b_ref, out_ref):
    acc = jnp.dot(x_ref[...], wih_ref[...], preferred_element_type=jnp.float32)
    acc = acc + jnp.dot(h_ref[...], whh_ref[...], preferred_element_type=jnp.float32)
    out_ref[...] = jnp.maximum(acc + b_ref[...], 0.0).astype(out_ref.dtype)


def prepare_rnn_cell_params(w_ih, w_hh, bias, *, lane_multiple=128,
                            compute_dtype=None):
    """Pre-transpose / pad / (optionally) cast the weights ONCE.

    Cache the result and call rnn_cell_prepared per step so the transpose / pad
    HBM round-trips are not paid on every invocation.
    """
    H, I = w_ih.shape
    Ip = _round_up(I, lane_multiple)
    Hp = _round_up(H, lane_multiple)
    w_dtype = compute_dtype if compute_dtype is not None else jnp.float32
    wih_p = _pad_to(w_ih.T, (Ip, Hp)).astype(w_dtype)      # (Ip, Hp)
    whh_p = _pad_to(w_hh.T, (Hp, Hp)).astype(w_dtype)      # (Hp, Hp)
    b_p = _pad_to(bias.reshape(1, H), (1, Hp)).astype(jnp.float32)
    return wih_p, whh_p, b_p


def rnn_cell_prepared(x, h, wih_p, whh_p, b_p, *, batch_block=256):
    """One RNNCell step with pre-prepared (transposed, padded) weights."""
    B, _ = x.shape
    H = h.shape[1]
    Ip, Hp = wih_p.shape
    Bp = _round_up(B, 8)
    w_dtype = wih_p.dtype

    x_p = _pad_to(x, (Bp, Ip)).astype(w_dtype)
    h_p = _pad_to(h, (Bp, Hp)).astype(w_dtype)

    if Bp <= batch_block:
        # Small batch: gridless whole-array VMEM call.
        out_p = pl.pallas_call(
            rnn_cell_kernel,
            out_shape=jax.ShapeDtypeStruct((Bp, Hp), x.dtype),
            in_specs=[pl.BlockSpec(memory_space=pltpu.MemorySpace.VMEM)] * 5,
            out_specs=pl.BlockSpec(memory_space=pltpu.MemorySpace.VMEM),
        )(x_p, h_p, wih_p, whh_p, b_p)
    else:
        # Large batch: tile batch with a "parallel" grid axis; weights resident
        # and single-buffered (constant block index).
        tb = _round_up(batch_block, 8)
        Bp2 = _round_up(Bp, tb)
        x_p = _pad_to(x_p, (Bp2, Ip))
        h_p = _pad_to(h_p, (Bp2, Hp))
        resident = (2 * tb * (Ip + 2 * Hp) * _itemsize(w_dtype)
                    + (Ip + Hp) * Hp * _itemsize(w_dtype) + Hp * 4)
        vmem_limit = int(min(64 << 20, max(2 * resident + (1 << 20), 16 << 20)))
        out_p = pl.pallas_call(
            rnn_cell_kernel,
            out_shape=jax.ShapeDtypeStruct((Bp2, Hp), x.dtype),
            grid=(Bp2 // tb,),
            in_specs=[
                pl.BlockSpec((tb, Ip), lambda i: (i, 0)),
                pl.BlockSpec((tb, Hp), lambda i: (i, 0)),
                pl.BlockSpec((Ip, Hp), lambda i: (0, 0),
                             pipeline_mode=pl.Buffered(1)),
                pl.BlockSpec((Hp, Hp), lambda i: (0, 0),
                             pipeline_mode=pl.Buffered(1)),
                pl.BlockSpec((1, Hp), lambda i: (0, 0),
                             pipeline_mode=pl.Buffered(1)),
            ],
            out_specs=pl.BlockSpec((tb, Hp), lambda i: (i, 0)),
            compiler_params=pltpu.CompilerParams(
                dimension_semantics=("parallel",),
                vmem_limit_bytes=vmem_limit,
            ),
        )(x_p, h_p, wih_p, whh_p, b_p)

    return out_p[:B, :H]


def rnn_cell(x, h, w_ih, w_hh, bias, *, compute_dtype=None, lane_multiple=128):
    """One RNNCell step.  x: (B, I), h: (B, H) -> (B, H).  f32-exact by default."""
    params = prepare_rnn_cell_params(
        w_ih, w_hh, bias, lane_multiple=lane_multiple, compute_dtype=compute_dtype)
    return rnn_cell_prepared(x, h, *params)


# ---------------------------------------------------------------------------
# whole-sequence recurrence: time-chunked grid, W_hh VMEM-resident, h in scratch
# ---------------------------------------------------------------------------
def rnn_seq_kernel(pre_ref, whh_ref, h0_ref, out_ref, h_scr):
    # pre: (Tc, tb, Hp) f32 (= x@W_ih^T + b, bias already folded in)
    # whh: (Hp, Hp)  h0: (tb, Hp)  out: (Tc, tb, Hp)
    # h_scr: (tb, Hp) in the matmul-input dtype (f32 or bf16) — no per-step cast.
    @pl.when(pl.program_id(1) == 0)          # first time-chunk of this batch tile
    def _():
        h_scr[...] = h0_ref[...]

    def step(t, carry):
        h = h_scr[...]
        acc = jnp.dot(h, whh_ref[...], preferred_element_type=jnp.float32)
        new_h = jnp.maximum(pre_ref[t] + acc, 0.0)        # f32 pre-act + ReLU
        h_scr[...] = new_h.astype(h_scr.dtype)
        out_ref[t] = new_h.astype(out_ref.dtype)
        return carry

    jax.lax.fori_loop(0, pre_ref.shape[0], step, 0, unroll=True)


def rnn_sequence(xs, h0, w_ih, w_hh, bias, *, compute_dtype=jnp.bfloat16,
                 time_block=8, batch_block=None, lane_multiple=128):
    """Run the RNN cell over a whole sequence.

    xs: (T, B, I), h0: (B, H) -> (T, B, H) of all hidden states.
    compute_dtype=jnp.bfloat16 (default) uses bf16 MXU inputs with f32
    accumulation / epilogue; pass compute_dtype=None for the f32-exact path.
    """
    T, B, I = xs.shape
    H = w_ih.shape[0]

    Ip = _round_up(I, lane_multiple)
    Hp = _round_up(H, lane_multiple)
    Bp = _round_up(B, 8)
    if batch_block is None:
        tb = min(Bp, 128)
    else:
        tb = _round_up(min(batch_block, Bp), 8)
    Bp = _round_up(Bp, tb)
    Tc = max(1, min(time_block, T))
    Tp = _round_up(T, Tc)

    w_dtype = compute_dtype if compute_dtype is not None else jnp.float32
    state_dtype = w_dtype            # h scratch kept in the matmul-input dtype
    out_dtype = xs.dtype

    # ---- hoisted input projection: one big GEMM (xs @ W_ih^T + b), f32 out ----
    xs_p = _pad_to(xs, (T, Bp, Ip)).astype(w_dtype)
    wih_p = _pad_to(w_ih.T, (Ip, Hp)).astype(w_dtype)
    b_p = _pad_to(bias.reshape(1, H), (1, Hp)).astype(jnp.float32)
    pre = _linear_bias(xs_p.reshape(T * Bp, Ip), wih_p, b_p,
                       out_dtype=jnp.float32)
    pre = pre.reshape(T, Bp, Hp)
    if Bp > B:
        # bias leaked into padded batch rows; zero them so padded h rows stay 0.
        pre = pre * (jnp.arange(Bp) < B).astype(pre.dtype)[None, :, None]
    pre = _pad_to(pre, (Tp, Bp, Hp))

    # ---- recurrent part ----
    whh_p = _pad_to(w_hh.T, (Hp, Hp)).astype(w_dtype)
    h0_p = _pad_to(h0, (Bp, Hp)).astype(state_dtype)

    resident = (2 * Tc * tb * Hp * 4                         # pre blocks (x2 buf)
                + 2 * Tc * tb * Hp * _itemsize(out_dtype)    # out blocks (x2 buf)
                + Hp * Hp * _itemsize(w_dtype)               # W_hh^T (x1 buf)
                + 2 * tb * Hp * _itemsize(state_dtype)       # h0 blocks
                + tb * Hp * _itemsize(state_dtype))          # h scratch
    vmem_limit = int(min(64 << 20, max(2 * resident + (1 << 20), 16 << 20)))

    out_p = pl.pallas_call(
        rnn_seq_kernel,
        out_shape=jax.ShapeDtypeStruct((Tp, Bp, Hp), out_dtype),
        grid=(Bp // tb, Tp // Tc),               # (batch tiles, time chunks)
        in_specs=[
            pl.BlockSpec((Tc, tb, Hp), lambda b, t: (t, b, 0)),     # pre_x chunk
            pl.BlockSpec((Hp, Hp), lambda b, t: (0, 0),
                         pipeline_mode=pl.Buffered(1)),             # W_hh^T resident
            pl.BlockSpec((tb, Hp), lambda b, t: (b, 0)),            # h0 tile
        ],
        out_specs=pl.BlockSpec((Tc, tb, Hp), lambda b, t: (t, b, 0)),
        scratch_shapes=[pltpu.VMEM((tb, Hp), state_dtype)],         # recurrent state
        compiler_params=pltpu.CompilerParams(
            dimension_semantics=("parallel", "arbitrary"),  # batch || , time serial
            vmem_limit_bytes=vmem_limit,
        ),
    )(pre, whh_p, h0_p)

    return out_p[:T, :B, :H]


# ---------------------------------------------------------------------------
# demo / correctness check
# ---------------------------------------------------------------------------
if __name__ == "__main__":
    input_size = 16
    hidden_size = 32
    batch = 8
    seq_len = 8

    key = jax.random.PRNGKey(0)
    k_x, k_h, k_wih, k_whh, k_b, k_seq = jax.random.split(key, 6)

    # Deterministic param init mirroring reset_parameters: U(-stdv, stdv)
    stdv = 1.0 / math.sqrt(hidden_size)
    w_ih = jax.random.uniform(k_wih, (hidden_size, input_size),
                              jnp.float32, -stdv, stdv)
    w_hh = jax.random.uniform(k_whh, (hidden_size, hidden_size),
                              jnp.float32, -stdv, stdv)
    bias = jax.random.uniform(k_b, (hidden_size,), jnp.float32, -stdv, stdv)

    x = jax.random.normal(k_x, (batch, input_size), jnp.float32)
    h = jax.random.normal(k_h, (batch, hidden_size), jnp.float32)

    # ---- single step, f32 (matches the PyTorch module semantics) ----
    out = jax.block_until_ready(rnn_cell(x, h, w_ih, w_hh, bias))
    ref = jnp.maximum(x @ w_ih.T + bias + h @ w_hh.T, 0.0)
    assert out.shape == (batch, hidden_size)
    assert jnp.allclose(out, ref, atol=1e-5, rtol=1e-5)

    # ---- single step, bf16 MXU inputs, f32 accumulate (perf option) ----
    out_bf16 = jax.block_until_ready(
        rnn_cell(x, h, w_ih, w_hh, bias, compute_dtype=jnp.bfloat16))
    assert jnp.allclose(out_bf16, ref, atol=5e-2, rtol=5e-2)

    # ---- whole sequence: hoisted projection + time-chunked recurrence ----
    xs = jax.random.normal(k_seq, (seq_len, batch, input_size), jnp.float32)

    h_cur = h
    hs_ref = []
    for t in range(seq_len):
        h_cur = jnp.maximum(xs[t] @ w_ih.T + bias + h_cur @ w_hh.T, 0.0)
        hs_ref.append(h_cur)
    hs_ref = jnp.stack(hs_ref)

    # f32-exact path
    hs_f32 = jax.block_until_ready(
        rnn_sequence(xs, h, w_ih, w_hh, bias, compute_dtype=None))
    assert hs_f32.shape == (seq_len, batch, hidden_size)
    assert jnp.allclose(hs_f32, hs_ref, atol=1e-4, rtol=1e-4)

    # default bf16 perf path (error compounds with T; fine at T=8)
    hs_bf16 = jax.block_until_ready(rnn_sequence(xs, h, w_ih, w_hh, bias))
    assert hs_bf16.shape == (seq_len, batch, hidden_size)
    assert jnp.allclose(hs_bf16, hs_ref, atol=5e-2, rtol=5e-2)

    print("KERNEL_OK")
</pallas_src>

<mosaic_0001>
module attributes {stable_mosaic.version = 11 : i64} {
  func.func @rnn_cell_kernel(%arg0: memref<8x128xf32, #tpu.memory_space<vmem>>, %arg1: memref<8x128xf32, #tpu.memory_space<vmem>>, %arg2: memref<128x128xf32, #tpu.memory_space<vmem>>, %arg3: memref<128x128xf32, #tpu.memory_space<vmem>>, %arg4: memref<1x128xf32, #tpu.memory_space<vmem>>, %arg5: memref<8x128xf32, #tpu.memory_space<vmem>>) attributes {dimension_semantics = [], scalar_prefetch = 0 : i64, scratch_operands = 0 : i64, tpu.core_type = #tpu.core_type<tc>} {
    %c0 = arith.constant 0 : index
    %c0_0 = arith.constant 0 : index
    %0 = vector.load %arg0[%c0, %c0_0] : memref<8x128xf32, #tpu.memory_space<vmem>>, vector<8x128xf32>
    %c0_1 = arith.constant 0 : index
    %c0_2 = arith.constant 0 : index
    %1 = vector.load %arg2[%c0_1, %c0_2] : memref<128x128xf32, #tpu.memory_space<vmem>>, vector<128x128xf32>
    %cst = arith.constant dense<0.000000e+00> : vector<8x128xf32>
    %2 = tpu.matmul %0, %1, %cst {dimension_numbers = #tpu.dot_dimension_numbers<[1], [0], [0], [1], [0, 0, 1, 1], [], []>} : vector<8x128xf32>, vector<128x128xf32>, vector<8x128xf32> -> vector<8x128xf32>
    %c0_3 = arith.constant 0 : index
    %c0_4 = arith.constant 0 : index
    %3 = vector.load %arg1[%c0_3, %c0_4] : memref<8x128xf32, #tpu.memory_space<vmem>>, vector<8x128xf32>
    %c0_5 = arith.constant 0 : index
    %c0_6 = arith.constant 0 : index
    %4 = vector.load %arg3[%c0_5, %c0_6] : memref<128x128xf32, #tpu.memory_space<vmem>>, vector<128x128xf32>
    %cst_7 = arith.constant dense<0.000000e+00> : vector<8x128xf32>
    %5 = tpu.matmul %3, %4, %cst_7 {dimension_numbers = #tpu.dot_dimension_numbers<[1], [0], [0], [1], [0, 0, 1, 1], [], []>} : vector<8x128xf32>, vector<128x128xf32>, vector<8x128xf32> -> vector<8x128xf32>
    %6 = arith.addf %2, %5 : vector<8x128xf32>
    %c0_8 = arith.constant 0 : index
    %c0_9 = arith.constant 0 : index
    %7 = vector.load %arg4[%c0_8, %c0_9] : memref<1x128xf32, #tpu.memory_space<vmem>>, vector<1x128xf32>
    %8 = vector.broadcast %7 : vector<1x128xf32> to vector<8x128xf32>
    %9 = arith.addf %6, %8 : vector<8x128xf32>
    %cst_10 = arith.constant 0.000000e+00 : f32
    %10 = vector.broadcast %cst_10 : f32 to vector<8x128xf32>
    %11 = arith.maximumf %9, %10 : vector<8x128xf32>
    %c0_11 = arith.constant 0 : index
    %c0_12 = arith.constant 0 : index
    %12 = vector.load %arg5[%c0_11, %c0_12] : memref<8x128xf32, #tpu.memory_space<vmem>>, vector<8x128xf32>
    tpu.vector_store %arg5[%c0_11, %c0_12], %11 {strides = array<i32>} : memref<8x128xf32, #tpu.memory_space<vmem>>, vector<8x128xf32>,
    return
  }
}

</mosaic_0001>

<llo_original>
// kernel: tpu_custom_call.1
$region0: #{tpu_custom_call.1}
  #allocation0 [shape = 'u32[]', space=smem, size = 0x4, offset = 0x4, fixed_abs, tag = 'smem constant byte address 0x4 - core index']
  #allocation1 [shape = 'u32[144,128]{1,0:T(1,128)}', space=vmem, size = 0x12000, scoped, tag = 'internal scratch']
  %s0 = inlined_call_operand.hbm [shape: f32[8,128], index: 0, kind: input, shape index: {}]
  %s1 = inlined_call_operand.hbm [shape: f32[8,128], index: 1, kind: input, shape index: {}]
  %s2 = inlined_call_operand.hbm [shape: f32[128,128], index: 2, kind: input, shape index: {}]
  %s3 = inlined_call_operand.hbm [shape: f32[128,128], index: 3, kind: input, shape index: {}]
  %s4 = inlined_call_operand.vmem [shape: f32[1,128], index: 4, kind: input, shape index: {}]
  %s5 = inlined_call_operand.hbm [shape: f32[8,128], index: 5, kind: output, shape index: {}]
  %s6 = sld [smem:[#allocation0]]
  $region46: #{tpu_custom_call.1} parent=0
    _
  %s8 = ssub.s32 1, %s6
  %s9 = scalar_select 0, %s8, %s6
  $region1: #{tpu_custom_call.1} parent=0
    #allocation2 [shape = 'u8[4096]{0}', space=vmem, size = 0x1000, scoped, tag = 'input window, operand 0, single buffered']
    #allocation3 [shape = 's32[1]{0}', space=sflag, size = 0x4, scoped, tag = 'scoped memory for tpu_custom_call.1']
    #allocation4 [shape = 's32[1]{0}', space=sflag, size = 0x4, scoped, tag = 'scoped memory for tpu_custom_call.1']
    #allocation5 [shape = 'u8[4096]{0}', space=vmem, size = 0x1000, scoped, tag = 'input window, operand 1, single buffered']
    #allocation6 [shape = 's32[1]{0}', space=sflag, size = 0x4, scoped, tag = 'scoped memory for tpu_custom_call.1']
    #allocation7 [shape = 'u8[65536]{0}', space=vmem, size = 0x10000, scoped, tag = 'input window, operand 2, single buffered']
    #allocation8 [shape = 'u8[65536]{0}', space=vmem, size = 0x10000, scoped, tag = 'input window, operand 3, single buffered']
    #allocation9 [shape = 's32[1]{0}', space=sflag, size = 0x4, scoped, tag = 'scoped memory for tpu_custom_call.1']
    #allocation10 [shape = 'u8[4096]{0}', space=vmem, size = 0x1000, scoped, tag = 'output window, operand 0, single buffered']
    %10 = vsyncpa [#allocation3], 0
    %11 = vsyncpa [#allocation6], 0
    %12 = vsyncpa [#allocation9], 0
    %13 = vsyncpa [#allocation4], 0
    // Predicated region
    $region2: #{tpu_custom_call.1} parent=1 // pred_check
      _
    $region3: #{tpu_custom_call.1} parent=1 // pred_check_branch
      %15 = sbr.rel (0) target = $region5
    $region4: #{tpu_custom_call.1} parent=1 // pred_region
      %s17 = ssub.s32 128, 128
      %18 = vsyncadd [#allocation3], %s17
      %s20 = sshll.u32 [#allocation2], 4
      %s21 = int_to_ptr.vmem [resolvable:$true] %s20
      %23 = dma.hbm_to_vmem [thread:$0]  %s0, 128, %s21, [#allocation3]
    $region5: #{tpu_custom_call.1} parent=1 // pred_fallthru
      _
    // Predicated region
    $region6: #{tpu_custom_call.1} parent=1 // pred_check
      _
    $region7: #{tpu_custom_call.1} parent=1 // pred_check_branch
      %25 = sbr.rel (0) target = $region9
    $region8: #{tpu_custom_call.1} parent=1 // pred_region
      %s27 = ssub.s32 128, 128
      %28 = vsyncadd [#allocation6], %s27
      %s30 = sshll.u32 [#allocation5], 4
      %s31 = int_to_ptr.vmem [resolvable:$true] %s30
      %33 = dma.hbm_to_vmem [thread:$0]  %s1, 128, %s31, [#allocation6]
    $region9: #{tpu_custom_call.1} parent=1 // pred_fallthru
      _
    // Predicated region
    $region10: #{tpu_custom_call.1} parent=1 // pred_check
      _
    $region11: #{tpu_custom_call.1} parent=1 // pred_check_branch
      %35 = sbr.rel (0) target = $region13
    $region12: #{tpu_custom_call.1} parent=1 // pred_region
      %s37 = ssub.s32 2048, 2048
      %38 = vsyncadd [#allocation6], %s37
      %s39 = sshll.u32 [#allocation7], 4
      %s40 = int_to_ptr.vmem [resolvable:$true] %s39
      %45 = dma.hbm_to_vmem [thread:$0]  %s2, 2048, %s40, [#allocation6], 128, 128, 8
    $region13: #{tpu_custom_call.1} parent=1 // pred_fallthru
      _
    // Predicated region
    $region14: #{tpu_custom_call.1} parent=1 // pred_check
      _
    $region15: #{tpu_custom_call.1} parent=1 // pred_check_branch
      %47 = sbr.rel (0) target = $region17
    $region16: #{tpu_custom_call.1} parent=1 // pred_region
      %s49 = ssub.s32 2048, 2048
      %50 = vsyncadd [#allocation9], %s49
      %s51 = sshll.u32 [#allocation8], 4
      %s52 = int_to_ptr.vmem [resolvable:$true] %s51
      %57 = dma.hbm_to_vmem [thread:$0]  %s3, 2048, %s52, [#allocation9], 128, 128, 8
    $region17: #{tpu_custom_call.1} parent=1 // pred_fallthru
      _
    // Predicated region
    $region18: #{tpu_custom_call.1} parent=1 // pred_check
      _
    $region19: #{tpu_custom_call.1} parent=1 // pred_check_branch
      %59 = sbr.rel (0) target = $region21
    $region20: #{tpu_custom_call.1} parent=1 // pred_region
      _
    $region21: #{tpu_custom_call.1} parent=1 // pred_fallthru
      _
    // Predicated region
    $region22: #{tpu_custom_call.1} parent=1 // pred_check
      _
    $region23: #{tpu_custom_call.1} parent=1 // pred_check_branch
      %61 = sbr.rel (0) target = $region25
    $region24: #{tpu_custom_call.1} parent=1 // pred_region
      %62 = dma.done [#allocation3], 128
    $region25: #{tpu_custom_call.1} parent=1 // pred_fallthru
      _
    // Predicated region
    $region26: #{tpu_custom_call.1} parent=1 // pred_check
      _
    $region27: #{tpu_custom_call.1} parent=1 // pred_check_branch
      %64 = sbr.rel (0) target = $region29
    $region28: #{tpu_custom_call.1} parent=1 // pred_region
      %65 = dma.done [#allocation6], 128
    $region29: #{tpu_custom_call.1} parent=1 // pred_fallthru
      _
    // Predicated region
    $region30: #{tpu_custom_call.1} parent=1 // pred_check
      _
    $region31: #{tpu_custom_call.1} parent=1 // pred_check_branch
      %67 = sbr.rel (0) target = $region33
    $region32: #{tpu_custom_call.1} parent=1 // pred_region
      %68 = dma.done [#allocation6], 2048
    $region33: #{tpu_custom_call.1} parent=1 // pred_fallthru
      _
    // Predicated region
    $region34: #{tpu_custom_call.1} parent=1 // pred_check
      _
    $region35: #{tpu_custom_call.1} parent=1 // pred_check_branch
      %70 = sbr.rel (0) target = $region37
    $region36: #{tpu_custom_call.1} parent=1 // pred_region
      %71 = dma.done [#allocation9], 2048
    $region37: #{tpu_custom_call.1} parent=1 // pred_fallthru
      _
    %v72 = vld [vmem:[#allocation2] sm:$0xff]
    %v73 = vld [vmem:[#allocation7] sm:$0xff]
    %v74 = vld [vmem:[#allocation7 + $0x8] sm:$0xff]
    %v75 = vld [vmem:[#allocation7 + $0x10] sm:$0xff]
    %v76 = vld [vmem:[#allocation7 + $0x18] sm:$0xff]
    %v77 = vld [vmem:[#allocation7 + $0x20] sm:$0xff]
    %v78 = vld [vmem:[#allocation7 + $0x28] sm:$0xff]
    %v79 = vld [vmem:[#allocation7 + $0x30] sm:$0xff]
    %v80 = vld [vmem:[#allocation7 + $0x38] sm:$0xff]
    %v81 = vld [vmem:[#allocation7 + $0x40] sm:$0xff]
    %v82 = vld [vmem:[#allocation7 + $0x48] sm:$0xff]
    %v83 = vld [vmem:[#allocation7 + $0x50] sm:$0xff]
    %v84 = vld [vmem:[#allocation7 + $0x58] sm:$0xff]
    %v85 = vld [vmem:[#allocation7 + $0x60] sm:$0xff]
    %v86 = vld [vmem:[#allocation7 + $0x68] sm:$0xff]
    %v87 = vld [vmem:[#allocation7 + $0x70] sm:$0xff]
    %v88 = vld [vmem:[#allocation7 + $0x78] sm:$0xff]
    %v89 = vld [vmem:[#allocation5] sm:$0xff]
    %v90 = vld [vmem:[#allocation8] sm:$0xff]
    %v91 = vld [vmem:[#allocation8 + $0x8] sm:$0xff]
    %v92 = vld [vmem:[#allocation8 + $0x10] sm:$0xff]
    %v93 = vld [vmem:[#allocation8 + $0x18] sm:$0xff]
    %v94 = vld [vmem:[#allocation8 + $0x20] sm:$0xff]
    %v95 = vld [vmem:[#allocation8 + $0x28] sm:$0xff]
    %v96 = vld [vmem:[#allocation8 + $0x30] sm:$0xff]
    %v97 = vld [vmem:[#allocation8 + $0x38] sm:$0xff]
    %v98 = vld [vmem:[#allocation8 + $0x40] sm:$0xff]
    %v99 = vld [vmem:[#allocation8 + $0x48] sm:$0xff]
    %v100 = vld [vmem:[#allocation8 + $0x50] sm:$0xff]
    %v101 = vld [vmem:[#allocation8 + $0x58] sm:$0xff]
    %v102 = vld [vmem:[#allocation8 + $0x60] sm:$0xff]
    %v103 = vld [vmem:[#allocation8 + $0x68] sm:$0xff]
    %v104 = vld [vmem:[#allocation8 + $0x70] sm:$0xff]
    %v105 = vld [vmem:[#allocation8 + $0x78] sm:$0xff]
    %106 = vmatprep.subr.mxu0 0.0
    %107 = vmatpush1.msra.mxu0 %v105
    %108 = vmatprep.subr.mxu0 0.0
    %109 = vmatpush1.msra.mxu0 %v104
    %110 = vmatprep.subr.mxu0 0.0
    %111 = vmatpush1.msra.mxu0 %v103
    %112 = vmatprep.subr.mxu0 0.0
    %113 = vmatpush1.msra.mxu0 %v102
    %114 = vmatprep.subr.mxu0 0.0
    %115 = vmatpush1.msra.mxu0 %v101
    %116 = vmatprep.subr.mxu0 0.0
    %117 = vmatpush1.msra.mxu0 %v100
    %118 = vmatprep.subr.mxu0 0.0
    %119 = vmatpush1.msra.mxu0 %v99
    %120 = vmatprep.subr.mxu0 0.0
    %121 = vmatpush1.msra.mxu0 %v98
    %122 = vmatprep.subr.mxu0 0.0
    %123 = vmatpush1.msra.mxu0 %v97
    %124 = vmatprep.subr.mxu0 0.0
    %125 = vmatpush1.msra.mxu0 %v96
    %126 = vmatprep.subr.mxu0 0.0
    %127 = vmatpush1.msra.mxu0 %v95
    %128 = vmatprep.subr.mxu0 0.0
    %129 = vmatpush1.msra.mxu0 %v94
    %130 = vmatprep.subr.mxu0 0.0
    %131 = vmatpush1.msra.mxu0 %v93
    %132 = vmatprep.subr.mxu0 0.0
    %133 = vmatpush1.msra.mxu0 %v92
    %134 = vmatprep.subr.mxu0 0.0
    %135 = vmatpush1.msra.mxu0 %v91
    %136 = vmatprep.subr.mxu0 0.0
    %137 = vmatpush1.msra.mxu0 %v90
    %138 = vmatprep.subr.mxu0 0.0
    %139 = vmatpush2.msra.mxu0 0.0
    %140 = vmatprep.subr.mxu0 0.0
    %141 = vmatpush2.msra.mxu0 0.0
    %142 = vmatprep.subr.mxu0 0.0
    %143 = vmatpush2.msra.mxu0 0.0
    %144 = vmatprep.subr.mxu0 0.0
    %145 = vmatpush2.msra.mxu0 0.0
    %146 = vmatprep.subr.mxu0 0.0
    %147 = vmatpush2.msra.mxu0 0.0
    %148 = vmatprep.subr.mxu0 0.0
    %149 = vmatpush2.msra.mxu0 0.0
    %150 = vmatprep.subr.mxu0 0.0
    %151 = vmatpush2.msra.mxu0 0.0
    %152 = vmatprep.subr.mxu0 0.0
    %153 = vmatpush2.msra.mxu0 0.0
    %154 = vmatprep.subr.mxu0 0.0
    %155 = vmatpush2.msra.mxu0 0.0
    %156 = vmatprep.subr.mxu0 0.0
    %157 = vmatpush2.msra.mxu0 0.0
    %158 = vmatprep.subr.mxu0 0.0
    %159 = vmatpush2.msra.mxu0 0.0
    %160 = vmatprep.subr.mxu0 0.0
    %161 = vmatpush2.msra.mxu0 0.0
    %162 = vmatprep.subr.mxu0 0.0
    %163 = vmatpush2.msra.mxu0 0.0
    %164 = vmatprep.subr.mxu0 0.0
    %165 = vmatpush2.msra.mxu0 0.0
    %166 = vmatprep.subr.mxu0 0.0
    %167 = vmatpush2.msra.mxu0 0.0
    %168 = vmatprep.subr.mxu0 0.0
    %169 = vmatpush2.msra.mxu0 0.0
    %170 = vmatprep.mubr.f32.mxu0 0.0
    %171 = vmatmul.mubr.f32.gmra.mxu0 %v89
    %v172 = vpop.f32.mrf.mxu0
    %v173 = vadd.f32 0.0, %v172
    %v174 = vpop.f32.mrf.mxu0
    %175 = vdwg.mxu0
    %176 = vmatprep.subr.mxu0 0.0
    %177 = vmatpush1.msra.mxu0 %v88
    %178 = vmatprep.subr.mxu0 0.0
    %179 = vmatpush1.msra.mxu0 %v87
    %180 = vmatprep.subr.mxu0 0.0
    %181 = vmatpush1.msra.mxu0 %v86
    %182 = vmatprep.subr.mxu0 0.0
    %183 = vmatpush1.msra.mxu0 %v85
    %184 = vmatprep.subr.mxu0 0.0
    %185 = vmatpush1.msra.mxu0 %v84
    %186 = vmatprep.subr.mxu0 0.0
    %187 = vmatpush1.msra.mxu0 %v83
    %188 = vmatprep.subr.mxu0 0.0
    %189 = vmatpush1.msra.mxu0 %v82
    %190 = vmatprep.subr.mxu0 0.0
    %191 = vmatpush1.msra.mxu0 %v81
    %192 = vmatprep.subr.mxu0 0.0
    %193 = vmatpush1.msra.mxu0 %v80
    %194 = vmatprep.subr.mxu0 0.0
    %195 = vmatpush1.msra.mxu0 %v79
    %196 = vmatprep.subr.mxu0 0.0
    %197 = vmatpush1.msra.mxu0 %v78
    %198 = vmatprep.subr.mxu0 0.0
    %199 = vmatpush1.msra.mxu0 %v77
    %200 = vmatprep.subr.mxu0 0.0
    %201 = vmatpush1.msra.mxu0 %v76
    %202 = vmatprep.subr.mxu0 0.0
    %203 = vmatpush1.msra.mxu0 %v75
    %204 = vmatprep.subr.mxu0 0.0
    %205 = vmatpush1.msra.mxu0 %v74
    %206 = vmatprep.subr.mxu0 0.0
    %207 = vmatpush1.msra.mxu0 %v73
    %208 = vmatprep.subr.mxu0 0.0
    %209 = vmatpush2.msra.mxu0 0.0
    %210 = vmatprep.subr.mxu0 0.0
    %211 = vmatpush2.msra.mxu0 0.0
    %212 = vmatprep.subr.mxu0 0.0
    %213 = vmatpush2.msra.mxu0 0.0
    %214 = vmatprep.subr.mxu0 0.0
    %215 = vmatpush2.msra.mxu0 0.0
    %216 = vmatprep.subr.mxu0 0.0
    %217 = vmatpush2.msra.mxu0 0.0
    %218 = vmatprep.subr.mxu0 0.0
    %219 = vmatpush2.msra.mxu0 0.0
    %220 = vmatprep.subr.mxu0 0.0
    %221 = vmatpush2.msra.mxu0 0.0
    %222 = vmatprep.subr.mxu0 0.0
    %223 = vmatpush2.msra.mxu0 0.0
    %224 = vmatprep.subr.mxu0 0.0
    %225 = vmatpush2.msra.mxu0 0.0
    %226 = vmatprep.subr.mxu0 0.0
    %227 = vmatpush2.msra.mxu0 0.0
    %228 = vmatprep.subr.mxu0 0.0
    %229 = vmatpush2.msra.mxu0 0.0
    %230 = vmatprep.subr.mxu0 0.0
    %231 = vmatpush2.msra.mxu0 0.0
    %232 = vmatprep.subr.mxu0 0.0
    %233 = vmatpush2.msra.mxu0 0.0
    %234 = vmatprep.subr.mxu0 0.0
    %235 = vmatpush2.msra.mxu0 0.0
    %236 = vmatprep.subr.mxu0 0.0
    %237 = vmatpush2.msra.mxu0 0.0
    %238 = vmatprep.subr.mxu0 0.0
    %239 = vmatpush2.msra.mxu0 0.0
    %240 = vmatprep.mubr.f32.mxu0 0.0
    %241 = vmatmul.mubr.f32.gmra.mxu0 %v72
    %v242 = vpop.f32.mrf.mxu0
    %v243 = vadd.f32 %v173, %v242
    %v244 = vpop.f32.mrf.mxu0
    %245 = vdwg.mxu0
    %v246 = vld [vmem:[%s4] sm:$0x1]
    %v248 = vlaneseq
    %v249 = vshrl.u32 %v248, 7
    %v250 = vsub.s32 0, %v249
    %v251 = vrot.slane %v246, %v250
    %v253 = vadd.f32 %v243, %v251
    %v254 = vmax.f32 %v253, 0.0
    %255 = vst [vmem:[#allocation10] sm:$0xff] %v254
    // Predicated region
    $region38: #{tpu_custom_call.1} parent=1 // pred_check
      _
    $region39: #{tpu_custom_call.1} parent=1 // pred_check_branch
      %257 = sbr.rel (0) target = $region41
    $region40: #{tpu_custom_call.1} parent=1 // pred_region
      %s259 = ssub.s32 128, 128
      %260 = vsyncadd [#allocation4], %s259
      %s262 = sshll.u32 [#allocation10], 4
      %s263 = int_to_ptr.vmem [resolvable:$true] %s262
      %265 = dma.vmem_to_hbm [thread:$0]  %s263, 128, %s5, [#allocation4]
    $region41: #{tpu_custom_call.1} parent=1 // pred_fallthru
      _
    // Predicated region
    $region42: #{tpu_custom_call.1} parent=1 // pred_check
      _
    $region43: #{tpu_custom_call.1} parent=1 // pred_check_branch
      %267 = sbr.rel (0) target = $region45
    $region44: #{tpu_custom_call.1} parent=1 // pred_region
      %268 = dma.done [#allocation4], 128
    $region45: #{tpu_custom_call.1} parent=1 // pred_fallthru
      _
    %269 = vsyncpa [#allocation3], 1
    %270 = vsyncpa [#allocation6], 1
    %271 = vsyncpa [#allocation9], 1
    %272 = vsyncpa [#allocation4], 1

</llo_original>
